<compile_context>
chip_gen: v7x
topology: tpu7x:2x2x1
jax: 0.10.0
libtpu: 0.0.40
codegen_flags: <defaults>
</compile_context>

<pallas_src>
from functools import partial

import jax
import jax.numpy as jnp
from jax.experimental import pallas as pl
from jax.experimental.pallas import tpu as pltpu

LANES = 128
CHUNK_ROWS = 512        # rows per inner-loop iteration (256 KiB f32 temporaries)
MAX_BLOCK_ROWS = 8192   # (8192,128) f32 tile = 4 MiB; 2 inputs x 2 bufs = 16 MiB VMEM
NUM_SLICES = 2          # leading "parallel" grid axis -> ~2x on dual-TC chips (v7x)


def _dice_bce_kernel(rows, block_rows, chunk_rows, blocks_per_slice, fold_rows,
                     may_be_partial, x_ref, t_ref, pt_ref, s_ref, bce_ref):
    a_id = pl.program_id(1)
    blk = pl.program_id(0) * blocks_per_slice + a_id
    valid_rows = rows - blk * block_rows   # <= 0 for grid-padding steps
    n_chunks = block_rows // chunk_rows

    @pl.when(a_id == 0)
    def _():
        pt_ref[...] = jnp.zeros_like(pt_ref)
        s_ref[...] = jnp.zeros_like(s_ref)
        bce_ref[...] = jnp.zeros_like(bce_ref)

    def fold(v):
        # (chunk_rows, 128) -> (fold_rows, 128) via pure elementwise vreg adds.
        if fold_rows == 8:
            return v.reshape(chunk_rows // 8, 8, LANES).sum(axis=0)
        return v.sum(axis=0, keepdims=True)   # tiny single-block fallback

    def accumulate(base, chunk_valid):
        x = x_ref[pl.ds(base, chunk_rows), :].astype(jnp.float32)
        t = t_ref[pl.ds(base, chunk_rows), :].astype(jnp.float32)
        # One shared EUP exp per element: sigmoid and softplus both reuse e.
        e = jnp.exp(-jnp.abs(x))
        p = jnp.where(x >= 0.0, 1.0, e) / (1.0 + e)            # sigmoid(x), exact divide
        # BCE directly from logits (stable softplus form); the clamp mirrors
        # torch.binary_cross_entropy's -100 clamp on the log terms.
        bce = jnp.minimum(jnp.maximum(x, 0.0) - x * t + jnp.log1p(e), 100.0)
        pt = p * t
        s = p + t                                              # merged p/t accumulator
        if chunk_valid is not None:                            # ragged rows only
            keep = jax.lax.broadcasted_iota(jnp.int32, x.shape, 0) < chunk_valid
            zero = jnp.zeros_like(x)
            pt = jnp.where(keep, pt, zero)
            s = jnp.where(keep, s, zero)
            bce = jnp.where(keep, bce, zero)
        pt_ref[...] += fold(pt)
        s_ref[...] += fold(s)
        bce_ref[...] += fold(bce)

    def step(base, masked):
        if masked:
            chunk_valid = jnp.clip(valid_rows - base, 0, chunk_rows)

            @pl.when(chunk_valid > 0)
            def _():
                accumulate(base, chunk_valid)
        else:
            accumulate(base, None)

    def run(masked):
        if n_chunks == 1:
            step(0, masked)   # static full-block slice
        else:
            def body(c, carry):
                step(pl.multiple_of(c * chunk_rows, chunk_rows), masked)
                return carry
            jax.lax.fori_loop(0, n_chunks, body, None)

    if may_be_partial:
        is_full = valid_rows >= block_rows

        @pl.when(is_full)
        def _():
            run(False)        # steady-state blocks: no mask work at all

        @pl.when(jnp.logical_not(is_full))
        def _():
            run(True)         # at most one partial block per run
    else:
        run(False)


def _partial_sums(x2, t2, rows):
    """Pallas reduction over a (rows, 128) view; returns (sum_pt, sum_p_plus_t, sum_bce)."""
    if rows <= CHUNK_ROWS:
        block_rows = chunk_rows = rows
    else:
        block_rows = min(MAX_BLOCK_ROWS, (rows // CHUNK_ROWS) * CHUNK_ROWS)
        chunk_rows = CHUNK_ROWS
    total_blocks = pl.cdiv(rows, block_rows)
    num_slices = NUM_SLICES if total_blocks >= NUM_SLICES else 1
    blocks_per_slice = pl.cdiv(total_blocks, num_slices)
    fold_rows = 8 if chunk_rows % 8 == 0 else 1
    grid_padded = num_slices * blocks_per_slice != total_blocks
    may_be_partial = (rows % block_rows != 0) or grid_padded

    if grid_padded:
        def in_map(p, a):
            return (jnp.minimum(p * blocks_per_slice + a, total_blocks - 1), 0)
    else:
        def in_map(p, a):
            return (p * blocks_per_slice + a, 0)

    def out_spec():
        return pl.BlockSpec((fold_rows, LANES), lambda p, a: (p, 0))

    acc = jax.ShapeDtypeStruct((num_slices * fold_rows, LANES), jnp.float32)
    kernel = partial(_dice_bce_kernel, rows, block_rows, chunk_rows,
                     blocks_per_slice, fold_rows, may_be_partial)

    n_main = rows * LANES
    bytes_accessed = (n_main * (x2.dtype.itemsize + t2.dtype.itemsize)
                      + 3 * num_slices * fold_rows * LANES * 4)

    pt_p, s_p, bce_p = pl.pallas_call(
        kernel,
        out_shape=(acc, acc, acc),
        grid_spec=pltpu.PrefetchScalarGridSpec(
            num_scalar_prefetch=0,
            grid=(num_slices, blocks_per_slice),
            in_specs=[pl.BlockSpec((block_rows, LANES), in_map),
                      pl.BlockSpec((block_rows, LANES), in_map)],
            out_specs=(out_spec(), out_spec(), out_spec()),
        ),
        compiler_params=pltpu.CompilerParams(
            dimension_semantics=("parallel", "arbitrary"),
            vmem_limit_bytes=48 * 1024 * 1024),
        cost_estimate=pl.CostEstimate(flops=14 * n_main,
                                      transcendentals=3 * n_main,
                                      bytes_accessed=bytes_accessed),
    )(x2, t2)
    return jnp.sum(pt_p), jnp.sum(s_p), jnp.sum(bce_p)


@partial(jax.jit, static_argnames=("smooth",))
def dice_bce_loss(inputs, targets, smooth=1.0):
    """inputs: raw logits (any shape/dtype); targets: same shape, values in [0,1]."""
    assert inputs.shape == targets.shape
    n = inputs.size
    xf = inputs.reshape(-1)
    tf = targets.reshape(-1)
    rem = n % LANES
    main = n - rem

    if rem:
        # <128 trailing elements: partial sums in plain JAX (negligible HBM
        # traffic), added to the kernel's sums below.  No padded copy of the
        # full arrays is ever created.
        xt = xf[main:].astype(jnp.float32)
        tt = tf[main:].astype(jnp.float32)
        e = jnp.exp(-jnp.abs(xt))
        p_tail = jnp.where(xt >= 0.0, 1.0, e) / (1.0 + e)
        bce_tail = jnp.minimum(jnp.maximum(xt, 0.0) - xt * tt + jnp.log1p(e), 100.0)
        tail = (jnp.sum(p_tail * tt), jnp.sum(p_tail + tt), jnp.sum(bce_tail))
        # TODO(synk): xf[:main] may still copy the main prefix once when
        # n % 128 != 0; a manual-DMA (memory_space=pl.ANY) path would avoid it.
        xf = xf[:main]
        tf = tf[:main]
    else:
        tail = (jnp.float32(0.0), jnp.float32(0.0), jnp.float32(0.0))

    if main == 0:
        sum_pt, sum_s, sum_bce = tail
    else:
        rows = main // LANES
        k_pt, k_s, k_bce = _partial_sums(xf.reshape(rows, LANES),
                                         tf.reshape(rows, LANES), rows)
        sum_pt = k_pt + tail[0]
        sum_s = k_s + tail[1]
        sum_bce = k_bce + tail[2]

    smooth = float(smooth)
    dice_loss = 1.0 - (2.0 * sum_pt + smooth) / (sum_s + smooth)
    bce_mean = sum_bce / n
    return bce_mean + dice_loss


def _reference_dice_bce(inputs, targets, smooth=1.0):
    p = jax.nn.sigmoid(inputs.astype(jnp.float32)).reshape(-1)
    t = targets.astype(jnp.float32).reshape(-1)
    intersection = jnp.sum(p * t)
    dice = 1.0 - (2.0 * intersection + smooth) / (jnp.sum(p) + jnp.sum(t) + smooth)
    bce = jnp.mean(-(t * jnp.log(p) + (1.0 - t) * jnp.log1p(-p)))
    return bce + dice


if __name__ == "__main__":
    key = jax.random.PRNGKey(0)
    k1, k2, k3, k4 = jax.random.split(key, 4)

    # Primary case: NCHW segmentation logits / masks (matches the PyTorch module).
    inputs = jax.random.normal(k1, (2, 4, 16, 16), dtype=jnp.float32)
    targets = (jax.random.uniform(k2, (2, 4, 16, 16)) > 0.5).astype(jnp.float32)
    loss = dice_bce_loss(inputs, targets, smooth=1.0)
    jax.block_until_ready(loss)
    ref = _reference_dice_bce(inputs, targets, smooth=1.0)
    assert jnp.allclose(loss, ref, rtol=1e-5, atol=1e-5), (loss, ref)

    # Multi-block case: exercises the dual-slice grid and the masked partial block.
    inputs2 = jax.random.normal(k3, (2, 4, 96, 128), dtype=jnp.float32)
    targets2 = (jax.random.uniform(k4, (2, 4, 96, 128)) > 0.5).astype(jnp.float32)
    loss2 = dice_bce_loss(inputs2, targets2, smooth=1.0)
    ref2 = _reference_dice_bce(inputs2, targets2, smooth=1.0)
    assert jnp.allclose(loss2, ref2, rtol=1e-5, atol=1e-5), (loss2, ref2)

    # Size not a multiple of 128: exercises the JAX tail path (no padded copies).
    inputs3 = jax.random.normal(k1, (3, 5, 7, 11), dtype=jnp.float32)
    targets3 = (jax.random.uniform(k2, (3, 5, 7, 11)) > 0.5).astype(jnp.float32)
    loss3 = dice_bce_loss(inputs3, targets3, smooth=1.0)
    ref3 = _reference_dice_bce(inputs3, targets3, smooth=1.0)
    assert jnp.allclose(loss3, ref3, rtol=1e-5, atol=1e-5), (loss3, ref3)

    print("KERNEL_OK")
</pallas_src>

<mosaic_0001>
module attributes {stable_mosaic.version = 11 : i64} {
  func.func @_dice_bce_kernel(%arg0: i32, %arg1: i32, %arg2: memref<16x128xf32, #tpu.memory_space<vmem>>, %arg3: memref<16x128xf32, #tpu.memory_space<vmem>>, %arg4: memref<8x128xf32, #tpu.memory_space<vmem>>, %arg5: memref<8x128xf32, #tpu.memory_space<vmem>>, %arg6: memref<8x128xf32, #tpu.memory_space<vmem>>) attributes {dimension_semantics = [#tpu.dimension_semantics<parallel>, #tpu.dimension_semantics<arbitrary>], iteration_bounds = array<i64: 1, 1>, scalar_prefetch = 0 : i64, scratch_operands = 0 : i64, tpu.core_type = #tpu.core_type<tc>, window_params = [{transform_indices = @transform_0, window_bounds = array<i64: 16, 128>}, {transform_indices = @transform_1, window_bounds = array<i64: 16, 128>}, {transform_indices = @transform_2, window_bounds = array<i64: 8, 128>}, {transform_indices = @transform_3, window_bounds = array<i64: 8, 128>}, {transform_indices = @transform_4, window_bounds = array<i64: 8, 128>}]} {
    %c0_i32 = arith.constant 0 : i32
    %0 = arith.cmpi eq, %arg1, %c0_i32 : i32
    %1 = arith.extui %0 : i1 to i32
    %c0_i32_0 = arith.constant 0 : i32
    %2 = arith.cmpi ne, %1, %c0_i32_0 : i32
    scf.if %2 {
      %cst_24 = arith.constant 0.000000e+00 : f32
      %41 = vector.broadcast %cst_24 : f32 to vector<8x128xf32>
      %c0_25 = arith.constant 0 : index
      %c0_26 = arith.constant 0 : index
      %42 = vector.load %arg4[%c0_25, %c0_26] : memref<8x128xf32, #tpu.memory_space<vmem>>, vector<8x128xf32>
      tpu.vector_store %arg4[%c0_25, %c0_26], %41 {strides = array<i32>} : memref<8x128xf32, #tpu.memory_space<vmem>>, vector<8x128xf32>,
      %cst_27 = arith.constant 0.000000e+00 : f32
      %43 = vector.broadcast %cst_27 : f32 to vector<8x128xf32>
      %c0_28 = arith.constant 0 : index
      %c0_29 = arith.constant 0 : index
      %44 = vector.load %arg5[%c0_28, %c0_29] : memref<8x128xf32, #tpu.memory_space<vmem>>, vector<8x128xf32>
      tpu.vector_store %arg5[%c0_28, %c0_29], %43 {strides = array<i32>} : memref<8x128xf32, #tpu.memory_space<vmem>>, vector<8x128xf32>,
      %cst_30 = arith.constant 0.000000e+00 : f32
      %45 = vector.broadcast %cst_30 : f32 to vector<8x128xf32>
      %c0_31 = arith.constant 0 : index
      %c0_32 = arith.constant 0 : index
      %46 = vector.load %arg6[%c0_31, %c0_32] : memref<8x128xf32, #tpu.memory_space<vmem>>, vector<8x128xf32>
      tpu.vector_store %arg6[%c0_31, %c0_32], %45 {strides = array<i32>} : memref<8x128xf32, #tpu.memory_space<vmem>>, vector<8x128xf32>,
    } else {
    }
    %c0 = arith.constant 0 : index
    %c0_1 = arith.constant 0 : index
    %3 = vector.load %arg2[%c0, %c0_1] : memref<16x128xf32, #tpu.memory_space<vmem>>, vector<16x128xf32>
    %c0_2 = arith.constant 0 : index
    %c0_3 = arith.constant 0 : index
    %4 = vector.load %arg3[%c0_2, %c0_3] : memref<16x128xf32, #tpu.memory_space<vmem>>, vector<16x128xf32>
    %5 = math.absf %3 : vector<16x128xf32>
    %cst = arith.constant 0.000000e+00 : f32
    %6 = vector.broadcast %cst : f32 to vector<16x128xf32>
    %7 = arith.subf %6, %5 : vector<16x128xf32>
    %8 = math.exp %7 : vector<16x128xf32>
    %cst_4 = arith.constant 0.000000e+00 : f32
    %9 = vector.broadcast %cst_4 : f32 to vector<16x128xf32>
    %10 = arith.cmpf oge, %3, %9 : vector<16x128xf32>
    %cst_5 = arith.constant 1.000000e+00 : f32
    %11 = vector.broadcast %cst_5 : f32 to vector<16x128xf32>
    %12 = arith.select %10, %11, %8 : vector<16x128xi1>, vector<16x128xf32>
    %cst_6 = arith.constant 1.000000e+00 : f32
    %13 = vector.broadcast %cst_6 : f32 to vector<16x128xf32>
    %14 = arith.addf %13, %8 : vector<16x128xf32>
    %15 = arith.divf %12, %14 : vector<16x128xf32>
    %cst_7 = arith.constant 0.000000e+00 : f32
    %16 = vector.broadcast %cst_7 : f32 to vector<16x128xf32>
    %17 = arith.maximumf %3, %16 : vector<16x128xf32>
    %18 = arith.mulf %3, %4 : vector<16x128xf32>
    %19 = arith.subf %17, %18 : vector<16x128xf32>
    %20 = math.log1p %8 : vector<16x128xf32>
    %21 = arith.addf %19, %20 : vector<16x128xf32>
    %cst_8 = arith.constant 1.000000e+02 : f32
    %22 = vector.broadcast %cst_8 : f32 to vector<16x128xf32>
    %23 = arith.minimumf %21, %22 : vector<16x128xf32>
    %24 = arith.mulf %15, %4 : vector<16x128xf32>
    %25 = arith.addf %15, %4 : vector<16x128xf32>
    %c0_9 = arith.constant 0 : index
    %c0_10 = arith.constant 0 : index
    %26 = vector.load %arg4[%c0_9, %c0_10] : memref<8x128xf32, #tpu.memory_space<vmem>>, vector<8x128xf32>
    %27 = vector.shape_cast %24 : vector<16x128xf32> to vector<2x8x128xf32>
    %cst_11 = arith.constant dense<0.000000e+00> : vector<8x128xf32>
    %28 = vector.multi_reduction <add>, %27, %cst_11 [0] : vector<2x8x128xf32> to vector<8x128xf32>
    %29 = arith.addf %26, %28 : vector<8x128xf32>
    %c0_12 = arith.constant 0 : index
    %c0_13 = arith.constant 0 : index
    %30 = vector.load %arg4[%c0_12, %c0_13] : memref<8x128xf32, #tpu.memory_space<vmem>>, vector<8x128xf32>
    tpu.vector_store %arg4[%c0_12, %c0_13], %29 {strides = array<i32>} : memref<8x128xf32, #tpu.memory_space<vmem>>, vector<8x128xf32>,
    %c0_14 = arith.constant 0 : index
    %c0_15 = arith.constant 0 : index
    %31 = vector.load %arg5[%c0_14, %c0_15] : memref<8x128xf32, #tpu.memory_space<vmem>>, vector<8x128xf32>
    %32 = vector.shape_cast %25 : vector<16x128xf32> to vector<2x8x128xf32>
    %cst_16 = arith.constant dense<0.000000e+00> : vector<8x128xf32>
    %33 = vector.multi_reduction <add>, %32, %cst_16 [0] : vector<2x8x128xf32> to vector<8x128xf32>
    %34 = arith.addf %31, %33 : vector<8x128xf32>
    %c0_17 = arith.constant 0 : index
    %c0_18 = arith.constant 0 : index
    %35 = vector.load %arg5[%c0_17, %c0_18] : memref<8x128xf32, #tpu.memory_space<vmem>>, vector<8x128xf32>
    tpu.vector_store %arg5[%c0_17, %c0_18], %34 {strides = array<i32>} : memref<8x128xf32, #tpu.memory_space<vmem>>, vector<8x128xf32>,
    %c0_19 = arith.constant 0 : index
    %c0_20 = arith.constant 0 : index
    %36 = vector.load %arg6[%c0_19, %c0_20] : memref<8x128xf32, #tpu.memory_space<vmem>>, vector<8x128xf32>
    %37 = vector.shape_cast %23 : vector<16x128xf32> to vector<2x8x128xf32>
    %cst_21 = arith.constant dense<0.000000e+00> : vector<8x128xf32>
    %38 = vector.multi_reduction <add>, %37, %cst_21 [0] : vector<2x8x128xf32> to vector<8x128xf32>
    %39 = arith.addf %36, %38 : vector<8x128xf32>
    %c0_22 = arith.constant 0 : index
    %c0_23 = arith.constant 0 : index
    %40 = vector.load %arg6[%c0_22, %c0_23] : memref<8x128xf32, #tpu.memory_space<vmem>>, vector<8x128xf32>
    tpu.vector_store %arg6[%c0_22, %c0_23], %39 {strides = array<i32>} : memref<8x128xf32, #tpu.memory_space<vmem>>, vector<8x128xf32>,
    return
  }
  func.func @transform_0(%arg0: i32, %arg1: i32) -> (i32, i32) {
    %c1_i32 = arith.constant 1 : i32
    %0 = arith.muli %arg0, %c1_i32 : i32
    %1 = arith.addi %0, %arg1 : i32
    %c0_i32 = arith.constant 0 : i32
    %c0_i32_0 = arith.constant 0 : i32
    return %1, %c0_i32 : i32, i32
  }
  func.func @transform_1(%arg0: i32, %arg1: i32) -> (i32, i32) {
    %c1_i32 = arith.constant 1 : i32
    %0 = arith.muli %arg0, %c1_i32 : i32
    %1 = arith.addi %0, %arg1 : i32
    %c0_i32 = arith.constant 0 : i32
    %c0_i32_0 = arith.constant 0 : i32
    return %1, %c0_i32 : i32, i32
  }
  func.func @transform_2(%arg0: i32, %arg1: i32) -> (i32, i32) {
    %c0_i32 = arith.constant 0 : i32
    %c0_i32_0 = arith.constant 0 : i32
    return %arg0, %c0_i32 : i32, i32
  }
  func.func @transform_3(%arg0: i32, %arg1: i32) -> (i32, i32) {
    %c0_i32 = arith.constant 0 : i32
    %c0_i32_0 = arith.constant 0 : i32
    return %arg0, %c0_i32 : i32, i32
  }
  func.func @transform_4(%arg0: i32, %arg1: i32) -> (i32, i32) {
    %c0_i32 = arith.constant 0 : i32
    %c0_i32_0 = arith.constant 0 : i32
    return %arg0, %c0_i32 : i32, i32
  }
}

</mosaic_0001>

<llo_original>
// kernel: dice_bce_loss.1
$region0: #{dice_bce_loss.1}
  #allocation0 [shape = 'u32[]', space=smem, size = 0x4, offset = 0x4, fixed_abs, tag = 'smem constant byte address 0x4 - core index']
  #allocation1 [shape = 'u32[144,128]{1,0:T(1,128)}', space=vmem, size = 0x12000, scoped, tag = 'internal scratch']
  %s0 = inlined_call_operand.vmem [shape: f32[16,128], index: 0, kind: input, shape index: {}]
  %s1 = inlined_call_operand.vmem [shape: f32[16,128], index: 1, kind: input, shape index: {}]
  %s2 = inlined_call_operand.vmem [shape: f32[8,128], index: 2, kind: output, shape index: {0}]
  %s3 = inlined_call_operand.vmem [shape: f32[8,128], index: 3, kind: output, shape index: {1}]
  %s4 = inlined_call_operand.vmem [shape: f32[8,128], index: 4, kind: output, shape index: {2}]
  %5 = xla_tuple %s2, %s3, %s4
  %s6 = sld [smem:[#allocation0]]
  $region38: #{dice_bce_loss.1} parent=0
    _
  %s8 = ssub.s32 1, %s6
  %s9 = scalar_select 0, %s8, %s6
  // Predicated region
  $region2: #{dice_bce_loss.1} parent=0 // pred_check
    _
  $region3: #{dice_bce_loss.1} parent=0 // pred_check_branch
    %11 = sbr.rel (0) target = $region5
  $region4: #{dice_bce_loss.1} parent=0 // pred_region
    %s12 = sadd.s32 0, 0
    %s13 = smul.u32 2, %s12
    %p14 = scmp.lt.s32.totalorder %s13, 1
    %s15 = scalar_select %p14, %s13, 1
    %s16 = smul.addr %s15, 8
    %s17 = scalar_lea.vmem %s0, %s16
    %s18 = sadd.s32 0, 0
    %s19 = smul.u32 2, %s18
  $region5: #{dice_bce_loss.1} parent=0 // pred_fallthru
    _
  // Predicated region
  $region6: #{dice_bce_loss.1} parent=0 // pred_check
    _
  $region7: #{dice_bce_loss.1} parent=0 // pred_check_branch
    %21 = sbr.rel (0) target = $region9
  $region8: #{dice_bce_loss.1} parent=0 // pred_region
    %s22 = sadd.s32 0, 0
    %s23 = smul.u32 2, %s22
    %p24 = scmp.lt.s32.totalorder %s23, 1
    %s25 = scalar_select %p24, %s23, 1
    %s26 = smul.addr %s25, 8
    %s27 = scalar_lea.vmem %s1, %s26
    %s28 = sadd.s32 0, 0
    %s29 = smul.u32 2, %s28
  $region9: #{dice_bce_loss.1} parent=0 // pred_fallthru
    _
  %s30 = sadd.s32 0, 0
  %s31 = smul.u32 2, %s30
  %p32 = scmp.lt.s32.totalorder %s31, 1
  %s33 = scalar_select %p32, %s31, 1
  %s34 = smul.addr %s33, 8
  %s35 = scalar_lea.vmem %s0, %s34
  %s36 = sadd.s32 0, 0
  %s37 = smul.u32 2, %s36
  %p38 = scmp.lt.s32.totalorder %s37, 1
  %s39 = scalar_select %p38, %s37, 1
  %s40 = smul.addr %s39, 8
  %s41 = scalar_lea.vmem %s1, %s40
  %s42 = sadd.s32 0, 0
  %s43 = smul.u32 2, %s42
  %p44 = scmp.lt.s32.totalorder %s43, 1
  %s45 = scalar_select %p44, %s43, 1
  %s46 = smul.addr %s45, 8
  %s47 = scalar_lea.vmem %s0, %s46
  %s48 = sadd.s32 0, 0
  %s49 = smul.u32 2, %s48
  %s50 = sadd.s32 0, 0
  %s51 = smul.u32 2, %s50
  %p52 = scmp.lt.s32.totalorder %s51, 1
  %s53 = scalar_select %p52, %s51, 1
  %s54 = smul.addr %s53, 8
  %s55 = scalar_lea.vmem %s1, %s54
  %s56 = sadd.s32 0, 0
  %s57 = smul.u32 2, %s56
  %p58 = scmp.eq.s32.totalorder 0, 0
  // Predicated region
  $region10: #{dice_bce_loss.1} parent=0 // pred_check
    %p59 = pneg %p58
  $region11: #{dice_bce_loss.1} parent=0 // pred_check_branch
    %61 = sbr.rel (%p59) target = $region13
  $region12: #{dice_bce_loss.1} parent=0 // pred_region
    %62 = vst [vmem:[%s2] sm:$0xff] 0.0
    %63 = vst [vmem:[%s3] sm:$0xff] 0.0
    %64 = vst [vmem:[%s4] sm:$0xff] 0.0
  $region13: #{dice_bce_loss.1} parent=0 // pred_fallthru
    _
  %v65 = vld [vmem:[%s47] sm:$0xff]
  %v66 = vld [vmem:[%s47 + $0x8] sm:$0xff]
  %v67 = vld [vmem:[%s55] sm:$0xff]
  %v68 = vld [vmem:[%s55 + $0x8] sm:$0xff]
  %v69 = vand.u32 2147483647, %v65
  %v70 = vand.u32 2147483647, %v66
  %v71 = vsub.f32 0.0, %v69
  %v72 = vsub.f32 0.0, %v70
  %v73 = vmul.f32 %v71, 1.442695
  %v74 = vpow.pop %v73
  %v75 = vmul.f32 %v72, 1.442695
  %v76 = vpow.pop %v75
  %vm77 = vcmp.ge.f32.partialorder %v65, 0.0
  %vm78 = vcmp.ge.f32.partialorder %v66, 0.0
  %v79 = vsel %vm77, 1.0, %v74
  %v80 = vsel %vm78, 1.0, %v76
  %v81 = vadd.f32 %v74, 1.0
  %v82 = vadd.f32 %v76, 1.0
  %v83 = vrcp.pop %v81
  %v84 = vmul.f32 %v79, %v83
  %v85 = vrcp.pop %v82
  %v86 = vmul.f32 %v80, %v85
  %v87 = vmax.f32 %v65, 0.0
  %v88 = vmax.f32 %v66, 0.0
  %v89 = vmul.f32 %v65, %v67
  %v90 = vmul.f32 %v66, %v68
  %v91 = vsub.f32 %v87, %v89
  %v92 = vsub.f32 %v88, %v90
  %v93 = vadd.f32 %v74, 1.0
  %v94 = vlog2.pop %v93
  %v95 = vmul.f32 %v94, 0.6931472
  %v96 = vmul.f32 -0.5, %v74
  %v97 = vadd.f32 %v96, 1.0
  %v98 = vmul.f32 %v97, %v74
  %v99 = vand.u32 2147483647, %v74
  %vm100 = vcmp.lt.f32.partialorder %v99, 0.0004427343
  %v101 = vsel %vm100, %v98, %v95
  %v102 = vadd.f32 %v76, 1.0
  %v103 = vlog2.pop %v102
  %v104 = vmul.f32 %v103, 0.6931472
  %v105 = vmul.f32 -0.5, %v76
  %v106 = vadd.f32 %v105, 1.0
  %v107 = vmul.f32 %v106, %v76
  %v108 = vand.u32 2147483647, %v76
  %vm109 = vcmp.lt.f32.partialorder %v108, 0.0004427343
  %v110 = vsel %vm109, %v107, %v104
  %v111 = vadd.f32 %v91, %v101
  %v112 = vadd.f32 %v92, %v110
  %v113 = vmin.f32 %v111, 100.0
  %v114 = vmin.f32 %v112, 100.0
  %v115 = vmul.f32 %v84, %v67
  %v116 = vmul.f32 %v86, %v68
  %v117 = vadd.f32 %v84, %v67
  %v118 = vadd.f32 %v86, %v68
  %v119 = vld [vmem:[%s2] sm:$0xff]
  %v120 = vadd.f32 %v115, %v116
  %v121 = vadd.f32 %v119, %v120
  %122 = vst [vmem:[%s2] sm:$0xff] %v121
  %v123 = vld [vmem:[%s3] sm:$0xff]
  %v124 = vadd.f32 %v117, %v118
  %v125 = vadd.f32 %v123, %v124
  %126 = vst [vmem:[%s3] sm:$0xff] %v125
  %v127 = vld [vmem:[%s4] sm:$0xff]
  %v128 = vadd.f32 %v113, %v114
  %v129 = vadd.f32 %v127, %v128
  %130 = vst [vmem:[%s4] sm:$0xff] %v129
  // Predicated region
  $region14: #{dice_bce_loss.1} parent=0 // pred_check
    _
  $region15: #{dice_bce_loss.1} parent=0 // pred_check_branch
    %132 = sbr.rel (0) target = $region17
  $region16: #{dice_bce_loss.1} parent=0 // pred_region
    _
  $region17: #{dice_bce_loss.1} parent=0 // pred_fallthru
    _
  // Predicated region
  $region18: #{dice_bce_loss.1} parent=0 // pred_check
    _
  $region19: #{dice_bce_loss.1} parent=0 // pred_check_branch
    %134 = sbr.rel (0) target = $region21
  $region20: #{dice_bce_loss.1} parent=0 // pred_region
    _
  $region21: #{dice_bce_loss.1} parent=0 // pred_fallthru
    _
  // Predicated region
  $region22: #{dice_bce_loss.1} parent=0 // pred_check
    _
  $region23: #{dice_bce_loss.1} parent=0 // pred_check_branch
    %136 = sbr.rel (0) target = $region25
  $region24: #{dice_bce_loss.1} parent=0 // pred_region
    _
  $region25: #{dice_bce_loss.1} parent=0 // pred_fallthru
    _
  // Predicated region
  $region26: #{dice_bce_loss.1} parent=0 // pred_check
    _
  $region27: #{dice_bce_loss.1} parent=0 // pred_check_branch
    %138 = sbr.rel (0) target = $region29
  $region28: #{dice_bce_loss.1} parent=0 // pred_region
    _
  $region29: #{dice_bce_loss.1} parent=0 // pred_fallthru
    _
  // Predicated region
  $region30: #{dice_bce_loss.1} parent=0 // pred_check
    _
  $region31: #{dice_bce_loss.1} parent=0 // pred_check_branch
    %140 = sbr.rel (0) target = $region33
  $region32: #{dice_bce_loss.1} parent=0 // pred_region
    _
  $region33: #{dice_bce_loss.1} parent=0 // pred_fallthru
    _
  // Predicated region
  $region34: #{dice_bce_loss.1} parent=0 // pred_check
    _
  $region35: #{dice_bce_loss.1} parent=0 // pred_check_branch
    %142 = sbr.rel (0) target = $region37
  $region36: #{dice_bce_loss.1} parent=0 // pred_region
    _
  $region37: #{dice_bce_loss.1} parent=0 // pred_fallthru
    _

</llo_original>
